<compile_context>
chip_gen: v5e
topology: v5e:2x2
jax: 0.10.0
libtpu: 0.0.40
codegen_flags: <defaults>
</compile_context>

<pallas_src>
import functools
import math

import jax
import jax.numpy as jnp
from jax import lax
from jax.experimental import pallas as pl
from jax.experimental.pallas import tpu as pltpu

VERY_NEGATIVE_NUMBER = -1e30


class Config:
    hidden_size = 32
    intermediate_size = 64
    num_attention_heads = 4
    num_tree_nodes = 20
    num_dag_codes = 15          # rows produced by DAG attention
    code_size = 16              # = num_dag_codes + 1 (row 0 of dict_matrix = zero pad)
    num_ancestors = 4
    hidden_dropout_prob = 0.0   # inference: dropout == identity
    attention_probs_dropout_prob = 0.0
    # leaves_list / ancestors_list / masks_list filled in __main__


def _round_up(x, m):
    return ((x + m - 1) // m) * m


def _choose_block_bv(bv, c, max_rows=512):
    """Visits per grid step: whole batch if small, else the largest divisor of
    bv (multiple of 8) whose row count fits max_rows."""
    if bv * c <= max_rows:
        return bv
    best = None
    for nb in range(8, bv, 8):
        if bv % nb == 0 and nb * c <= max_rows:
            best = nb
    return best if best is not None else bv


# ----------------------------------------------------------------------------
# Kernel 1: DAGAttention2D -- all DAG codes in a single grid step
# ----------------------------------------------------------------------------
def dag_attention_kernel(leaves_ref, anc_ref, mask_ref, w1_ref, aux_ref, out_ref,
                         *, num_ancestors):
    f32, bf16 = jnp.float32, jnp.bfloat16
    neg = VERY_NEGATIVE_NUMBER

    m = mask_ref[...]                              # (R, 1)
    lv = leaves_ref[...] * m                       # (R, H)
    an = anc_ref[...] * m                          # (R, H) == ancestors * mask
    R, H = lv.shape
    A = num_ancestors
    N = R // A
    Hd = w1_ref.shape[1]

    # linear1 on concat(leaves*m, ancestors*m): single fused (R, 2H) @ (2H, Hd)
    cat = jnp.concatenate([lv, an], axis=-1)       # (R, 2H)
    t = jnp.maximum(
        jnp.dot(cat.astype(bf16), w1_ref[...], preferred_element_type=f32)
        + aux_ref[0:1, 0:Hd], 0.0)                 # (R, Hd)  relu
    # linear2 as multiply + lane-reduction (w2 stored transposed in aux row 1)
    s = jnp.sum(t * aux_ref[1:2, 0:Hd], axis=-1, keepdims=True) + aux_ref[2:3, 0:1]
    s = s + (1.0 - m) * neg                        # mask padded ancestors
    # grouped softmax over each code's A ancestors: a shared offset cancels per
    # group, so one global max is enough; masked rows underflow to exactly 0.
    gmax = jnp.max(s, axis=0, keepdims=True)
    e = jnp.exp(s - gmax)                          # (R, 1)

    nidx = lax.broadcasted_iota(jnp.int32, (N, 1), 0).astype(f32)
    ridc = lax.broadcasted_iota(jnp.int32, (1, R), 1).astype(f32)
    gid = jnp.floor((ridc + 0.5) * (1.0 / A))      # code id of each row
    grp = (nidx == gid).astype(f32)                # (N, R) membership matrix

    den = jnp.dot(grp, e, preferred_element_type=f32)        # (N, 1)
    num = jnp.dot(grp, e * an, preferred_element_type=f32)   # (N, H)
    out_ref[...] = num / (den + 1e-20)


def dag_attention(leaves_emb, anc_emb, masks, w1, b1, w2, b2):
    N, A, H = leaves_emb.shape
    Hd = w1.shape[1]
    R = N * A
    leaves2 = leaves_emb.reshape(R, H)
    anc2 = anc_emb.reshape(R, H)
    mask2 = masks.astype(jnp.float32).reshape(R, 1)

    aux_w = _round_up(Hd, 128)
    aux = jnp.zeros((8, aux_w), jnp.float32)
    aux = aux.at[0, :Hd].set(b1.reshape(-1))       # b1
    aux = aux.at[1, :Hd].set(w2.reshape(-1))       # w2^T
    aux = aux.at[2, 0].set(b2.reshape(-1)[0])      # b2

    out = pl.pallas_call(
        functools.partial(dag_attention_kernel, num_ancestors=A),
        out_shape=jax.ShapeDtypeStruct((N, H), jnp.float32),
        grid_spec=pltpu.PrefetchScalarGridSpec(
            num_scalar_prefetch=0, grid=(1,),
            in_specs=[
                pl.BlockSpec((R, H), lambda i: (0, 0)),
                pl.BlockSpec((R, H), lambda i: (0, 0)),
                pl.BlockSpec((R, 1), lambda i: (0, 0)),
                pl.BlockSpec((2 * H, Hd), lambda i: (0, 0)),
                pl.BlockSpec((8, aux_w), lambda i: (0, 0)),
            ],
            out_specs=pl.BlockSpec((N, H), lambda i: (0, 0)),
        ),
        compiler_params=pltpu.CompilerParams(dimension_semantics=("arbitrary",)),
    )(leaves2, anc2, mask2, w1.astype(jnp.bfloat16), aux)
    return out


# ----------------------------------------------------------------------------
# Kernel 2: batched encoder (dual attention + FFN + LayerNorms + pooling)
# ----------------------------------------------------------------------------
def knowledge_encoder_kernel(x_ref, xd_ref, mrow_ref, mcol_ref,
                             wslab_ref, wd_ref, bslab_ref, o_ref,
                             *, num_heads, codes_per_visit):
    f32, bf16 = jnp.float32, jnp.bfloat16
    neg = VERY_NEGATIVE_NUMBER

    x = x_ref[...]                     # (R, H) code embeddings (R = visits*codes)
    xd = xd_ref[...]                   # (R, H) DAG embeddings
    m_row = mrow_ref[0]                # (1, R) raw code mask, lane layout
    m_col = mcol_ref[...]              # (R, 1) raw code mask, sublane layout

    R, H = x.shape
    C = codes_per_visit
    NB = R // C                        # visits in this block
    nh = num_heads
    dh = H // nh
    scale = 1.0 / math.sqrt(dh)
    H3 = 3 * H
    I = wd_ref.shape[0]
    ck = _round_up(max(H3, I), 128)    # lane width of each packed-weight chunk

    # --- packed weights (bf16), 128-aligned lane chunks ---
    wqkv   = wslab_ref[:, 0 * ck:0 * ck + H3]
    wqkv_d = wslab_ref[:, 1 * ck:1 * ck + H3]
    wo     = wslab_ref[:, 2 * ck:2 * ck + H]
    wo_d   = wslab_ref[:, 3 * ck:3 * ck + H]
    wi     = wslab_ref[:, 4 * ck:4 * ck + I]
    wi_d   = wslab_ref[:, 5 * ck:5 * ck + I]
    wp1    = wslab_ref[:, 6 * ck:6 * ck + H]

    # --- packed biases / LayerNorm params (f32), one row each ---
    bqkv, bqkv_d   = bslab_ref[0:1, 0:H3], bslab_ref[1:2, 0:H3]
    bo, bo_d       = bslab_ref[2:3, 0:H], bslab_ref[3:4, 0:H]
    ln1_g, ln1_b   = bslab_ref[4:5, 0:H], bslab_ref[5:6, 0:H]
    ln1d_g, ln1d_b = bslab_ref[6:7, 0:H], bslab_ref[7:8, 0:H]
    bi, bi_d       = bslab_ref[8:9, 0:I], bslab_ref[9:10, 0:I]
    bd             = bslab_ref[10:11, 0:H]
    lno_g, lno_b   = bslab_ref[11:12, 0:H], bslab_ref[12:13, 0:H]
    bp1            = bslab_ref[13:14, 0:H]
    wp2row         = bslab_ref[14:15, 0:H]
    bp2            = bslab_ref[15:16, 0:1]

    # visit ids via float floor-div (exact for these small integers)
    ridx = lax.broadcasted_iota(jnp.int32, (R, 1), 0).astype(f32)
    cidx = lax.broadcasted_iota(jnp.int32, (1, R), 1).astype(f32)
    vis_col = jnp.floor((ridx + 0.5) * (1.0 / C))          # (R, 1)
    vis_row = jnp.floor((cidx + 0.5) * (1.0 / C))          # (1, R)

    # additive attention bias: block-diagonal per-visit mask + key-padding mask
    bias = jnp.where(vis_col == vis_row, 0.0, neg) + (1.0 - m_row) * neg  # (R, R)

    def mha(inp, w_qkv, b_qkv):
        qkv = jnp.dot(inp.astype(bf16), w_qkv, preferred_element_type=f32) + b_qkv
        parts = []
        for h in range(nh):
            q = qkv[:, h * dh:(h + 1) * dh].astype(bf16)
            k = qkv[:, H + h * dh:H + (h + 1) * dh].astype(bf16)
            v = qkv[:, 2 * H + h * dh:2 * H + (h + 1) * dh].astype(bf16)
            s = lax.dot_general(q, k, (((1,), (1,)), ((), ())),
                                preferred_element_type=f32) * scale + bias
            p = jax.nn.softmax(s, axis=-1)                  # f32; attn-drop = id
            parts.append(jnp.dot(p.astype(bf16), v, preferred_element_type=f32))
        return jnp.concatenate(parts, axis=-1)              # (R, H)

    ctx = mha(x, wqkv, bqkv)            # standard branch
    ctx_d = mha(xd, wqkv_d, bqkv_d)     # DAG branch

    def layer_norm(v, g, b):            # BertLayerNorm, eps=1e-12, f32 stats
        mu = jnp.mean(v, axis=-1, keepdims=True)
        var = jnp.mean(jnp.square(v - mu), axis=-1, keepdims=True)
        return (v - mu) * lax.rsqrt(var + 1e-12) * g + b

    # BertSelfOutputDag (dropout == identity)
    h1 = layer_norm(
        jnp.dot(ctx.astype(bf16), wo, preferred_element_type=f32) + bo + x,
        ln1_g, ln1_b)
    h1d = layer_norm(
        jnp.dot(ctx_d.astype(bf16), wo_d, preferred_element_type=f32) + bo_d + xd,
        ln1d_g, ln1d_b)

    # BertIntermediateDag: gelu(dense(h) + dense_dag(h_dag))
    # TODO(synk): tanh-approx gelu (erf lowering availability in Mosaic varies); diff ~1e-3.
    inter = jax.nn.gelu(
        jnp.dot(h1.astype(bf16), wi, preferred_element_type=f32) + bi
        + jnp.dot(h1d.astype(bf16), wi_d, preferred_element_type=f32) + bi_d,
        approximate=True)                                   # (R, I)

    hs = jnp.dot(inter.astype(bf16), wd_ref[...], preferred_element_type=f32) + bd
    hs = layer_norm(hs + h1 + h1d, lno_g, lno_b)            # (R, H)

    # AttentionPooling over codes of each visit (matmul-based grouping)
    t = jnp.tanh(jnp.dot(hs.astype(bf16), wp1, preferred_element_type=f32) + bp1)
    s = jnp.sum(t * wp2row, axis=-1, keepdims=True) + bp2   # (R, 1)
    s = s + (1.0 - m_col) * neg
    gmax = jnp.max(s, axis=0, keepdims=True)                # shared offset cancels
    e = jnp.exp(s - gmax)                                   # padded rows -> 0

    bidx = lax.broadcasted_iota(jnp.int32, (NB, 1), 0).astype(f32)
    grp = (bidx == vis_row).astype(f32)                     # (NB, R) visit membership
    den = jnp.dot(grp, e, preferred_element_type=f32)       # (NB, 1)
    num = jnp.dot(grp, e * hs, preferred_element_type=f32)  # (NB, H)
    o_ref[...] = (num / (den + 1e-20)).astype(o_ref.dtype)


def knowledge_encoder_forward(input_ids, code_mask, params, cfg):
    H, I = cfg.hidden_size, cfg.intermediate_size

    # --- DAG embedding table (kernel 1) ---
    leaves_emb = params["embed_init"][cfg.leaves_list]       # gathers = glue
    anc_emb = params["embed_init"][cfg.ancestors_list]
    dag_emb = dag_attention(leaves_emb, anc_emb, cfg.masks_list,
                            params["dag_w1"], params["dag_b1"],
                            params["dag_w2"], params["dag_b2"])
    dict_matrix = jnp.concatenate(
        [jnp.zeros((1, H), jnp.float32), dag_emb], axis=0)   # (N+1, H)

    # --- flattened per-(visit, code) inputs ---
    inputs = params["embed_inputs"][input_ids]               # (B, V, C, H)
    inputs_dag = dict_matrix[input_ids]
    B, V, C, _ = inputs.shape
    BV = B * V

    NB = _choose_block_bv(BV, C)       # visits per grid step
    G = BV // NB
    R = NB * C                         # rows per grid step

    x2 = inputs.reshape(BV * C, H)
    xd2 = inputs_dag.reshape(BV * C, H)
    m = code_mask.reshape(BV * C).astype(jnp.float32)
    m_row = m.reshape(G, 1, R)         # raw mask, lane layout (additive built in-kernel)
    m_col = m.reshape(BV * C, 1)       # raw mask, sublane layout

    # --- pack 24 weight/bias operands into 3 lane-aligned slabs ---
    ck = _round_up(max(3 * H, I), 128)

    def padw(w):
        return jnp.pad(w, ((0, 0), (0, ck - w.shape[1])))

    wslab = jnp.concatenate(
        [padw(params["wqkv"]), padw(params["wqkv_dag"]),
         padw(params["wo"]), padw(params["wo_dag"]),
         padw(params["wi"]), padw(params["wi_dag"]),
         padw(params["wp1"])], axis=1).astype(jnp.bfloat16)  # (H, 7*ck)

    def padr(v):
        return jnp.pad(v, ((0, 0), (0, ck - v.shape[1])))

    bslab = jnp.concatenate(
        [padr(params["bqkv"]), padr(params["bqkv_dag"]), padr(params["bo"]),
         padr(params["bo_dag"]), padr(params["ln1_g"]), padr(params["ln1_b"]),
         padr(params["ln1d_g"]), padr(params["ln1d_b"]), padr(params["bi"]),
         padr(params["bi_dag"]), padr(params["bd"]), padr(params["lno_g"]),
         padr(params["lno_b"]), padr(params["bp1"]), padr(params["wp2"].T),
         padr(params["bp2"])], axis=0)                       # (16, ck) f32

    wd_bf = params["wd"].astype(jnp.bfloat16)                # (I, H)

    kernel = functools.partial(knowledge_encoder_kernel,
                               num_heads=cfg.num_attention_heads,
                               codes_per_visit=C)
    pooled = pl.pallas_call(
        kernel,
        out_shape=jax.ShapeDtypeStruct((BV, H), jnp.float32),
        grid_spec=pltpu.PrefetchScalarGridSpec(
            num_scalar_prefetch=0, grid=(G,),
            in_specs=[
                pl.BlockSpec((R, H), lambda b: (b, 0)),
                pl.BlockSpec((R, H), lambda b: (b, 0)),
                pl.BlockSpec((1, 1, R), lambda b: (b, 0, 0)),
                pl.BlockSpec((R, 1), lambda b: (b, 0)),
                pl.BlockSpec(wslab.shape, lambda b: (0, 0)),   # resident weights
                pl.BlockSpec(wd_bf.shape, lambda b: (0, 0)),
                pl.BlockSpec(bslab.shape, lambda b: (0, 0)),
            ],
            out_specs=pl.BlockSpec((NB, H), lambda b: (b, 0)),
        ),
        compiler_params=pltpu.CompilerParams(
            dimension_semantics=("parallel",)),
    )(x2, xd2, m_row, m_col, wslab, wd_bf, bslab)

    visit_outs = pooled.reshape(B, V, H)   # == visit_pooling.view(-1, V, H)
    all_attentions = None                  # output_attentions=False
    return visit_outs, all_attentions


# ----------------------------------------------------------------------------
# Deterministic parameter init (nn.Linear stored as (in, out); x @ W + b)
# ----------------------------------------------------------------------------
def init_params(cfg, key):
    H, I = cfg.hidden_size, cfg.intermediate_size
    ks = iter(jax.random.split(key, 32))

    def w(shape, scale=0.02):
        return (scale * jax.random.normal(next(ks), shape)).astype(jnp.float32)

    zeros = lambda s: jnp.zeros(s, jnp.float32)
    ones = lambda s: jnp.ones(s, jnp.float32)

    return dict(
        embed_init=w((cfg.num_tree_nodes, H)),
        embed_inputs=w((cfg.code_size, H)),
        # DAGAttention2D
        dag_w1=w((2 * H, H)), dag_b1=zeros((1, H)),
        dag_w2=w((H, 1)), dag_b2=zeros((1, 1)),
        # BertSelfAttentionDag (q,k,v packed)
        wqkv=w((H, 3 * H)), bqkv=zeros((1, 3 * H)),
        wqkv_dag=w((H, 3 * H)), bqkv_dag=zeros((1, 3 * H)),
        # BertSelfOutputDag
        wo=w((H, H)), bo=zeros((1, H)),
        wo_dag=w((H, H)), bo_dag=zeros((1, H)),
        ln1_g=ones((1, H)), ln1_b=zeros((1, H)),
        ln1d_g=ones((1, H)), ln1d_b=zeros((1, H)),
        # BertIntermediateDag
        wi=w((H, I)), bi=zeros((1, I)),
        wi_dag=w((H, I)), bi_dag=zeros((1, I)),
        # outer dense + LayerNorm
        wd=w((I, H)), bd=zeros((1, H)),
        lno_g=ones((1, H)), lno_b=zeros((1, H)),
        # AttentionPooling
        wp1=w((H, H)), bp1=zeros((1, H)),
        wp2=w((H, 1)), bp2=zeros((1, 1)),
    )


if __name__ == "__main__":
    cfg = Config()
    key = jax.random.PRNGKey(0)
    k_p, k_leaf, k_anc, k_mask, k_ids, k_cm = jax.random.split(key, 6)

    params = init_params(cfg, k_p)

    N_dag, A = cfg.num_dag_codes, cfg.num_ancestors
    cfg.leaves_list = jax.random.randint(k_leaf, (N_dag, A), 0, cfg.num_tree_nodes)
    cfg.ancestors_list = jax.random.randint(k_anc, (N_dag, A), 0, cfg.num_tree_nodes)
    masks = (jax.random.uniform(k_mask, (N_dag, A)) > 0.3).astype(jnp.float32)
    cfg.masks_list = masks.at[:, 0].set(1.0)

    B, V, C = 2, 4, 8
    input_ids = jax.random.randint(k_ids, (B, V, C), 0, cfg.code_size)
    code_mask = (jax.random.uniform(k_cm, (B, V, C)) > 0.25).astype(jnp.float32)
    code_mask = code_mask.at[:, :, 0].set(1.0)

    visit_outs, all_attentions = knowledge_encoder_forward(
        input_ids, code_mask, params, cfg)
    jax.block_until_ready(visit_outs)

    assert visit_outs.shape == (B, V, cfg.hidden_size)
    assert bool(jnp.all(jnp.isfinite(visit_outs)))
    print("KERNEL_OK")
</pallas_src>

<mosaic_0001>
module attributes {stable_mosaic.version = 11 : i64} {
  func.func @dag_attention_kernel(%arg0: i32, %arg1: memref<60x32xf32, #tpu.memory_space<vmem>>, %arg2: memref<60x32xf32, #tpu.memory_space<vmem>>, %arg3: memref<60x1xf32, #tpu.memory_space<vmem>>, %arg4: memref<64x32xbf16, #tpu.memory_space<vmem>>, %arg5: memref<8x128xf32, #tpu.memory_space<vmem>>, %arg6: memref<15x32xf32, #tpu.memory_space<vmem>>) attributes {dimension_semantics = [#tpu.dimension_semantics<arbitrary>], iteration_bounds = array<i64: 1>, scalar_prefetch = 0 : i64, scratch_operands = 0 : i64, tpu.core_type = #tpu.core_type<tc>, window_params = [{pipeline_mode = #tpu.pipeline_mode<synchronous>, transform_indices = @transform_0, window_bounds = array<i64: 60, 32>}, {pipeline_mode = #tpu.pipeline_mode<synchronous>, transform_indices = @transform_1, window_bounds = array<i64: 60, 32>}, {pipeline_mode = #tpu.pipeline_mode<synchronous>, transform_indices = @transform_2, window_bounds = array<i64: 60, 1>}, {pipeline_mode = #tpu.pipeline_mode<synchronous>, transform_indices = @transform_3, window_bounds = array<i64: 64, 32>}, {pipeline_mode = #tpu.pipeline_mode<synchronous>, transform_indices = @transform_4, window_bounds = array<i64: 8, 128>}, {pipeline_mode = #tpu.pipeline_mode<synchronous>, transform_indices = @transform_5, window_bounds = array<i64: 15, 32>}]} {
    %c0 = arith.constant 0 : index
    %c0_0 = arith.constant 0 : index
    %0 = vector.load %arg3[%c0, %c0_0] : memref<60x1xf32, #tpu.memory_space<vmem>>, vector<60x1xf32>
    %c0_1 = arith.constant 0 : index
    %c0_2 = arith.constant 0 : index
    %1 = vector.load %arg1[%c0_1, %c0_2] : memref<60x32xf32, #tpu.memory_space<vmem>>, vector<60x32xf32>
    %2 = vector.broadcast %0 : vector<60x1xf32> to vector<60x32xf32>
    %3 = arith.mulf %1, %2 : vector<60x32xf32>
    %c0_3 = arith.constant 0 : index
    %c0_4 = arith.constant 0 : index
    %4 = vector.load %arg2[%c0_3, %c0_4] : memref<60x32xf32, #tpu.memory_space<vmem>>, vector<60x32xf32>
    %5 = vector.broadcast %0 : vector<60x1xf32> to vector<60x32xf32>
    %6 = arith.mulf %4, %5 : vector<60x32xf32>
    %7 = tpu.concatenate %3, %6 in 1 : vector<60x32xf32>, vector<60x32xf32> -> vector<60x64xf32>
    %8 = arith.truncf %7 : vector<60x64xf32> to vector<60x64xbf16>
    %c0_5 = arith.constant 0 : index
    %c0_6 = arith.constant 0 : index
    %9 = vector.load %arg4[%c0_5, %c0_6] : memref<64x32xbf16, #tpu.memory_space<vmem>>, vector<64x32xbf16>
    %cst = arith.constant dense<0.000000e+00> : vector<60x32xf32>
    %10 = tpu.matmul %8, %9, %cst {dimension_numbers = #tpu.dot_dimension_numbers<[1], [0], [0], [1], [0, 0, 1, 1], [], []>} : vector<60x64xbf16>, vector<64x32xbf16>, vector<60x32xf32> -> vector<60x32xf32>
    %c0_7 = arith.constant 0 : index
    %c0_8 = arith.constant 0 : index
    %11 = vector.load %arg5[%c0_7, %c0_8] : memref<8x128xf32, #tpu.memory_space<vmem>>, vector<1x32xf32>
    %12 = vector.broadcast %11 : vector<1x32xf32> to vector<60x32xf32>
    %13 = arith.addf %10, %12 : vector<60x32xf32>
    %cst_9 = arith.constant 0.000000e+00 : f32
    %14 = vector.broadcast %cst_9 : f32 to vector<60x32xf32>
    %15 = arith.maximumf %13, %14 : vector<60x32xf32>
    %c1 = arith.constant 1 : index
    %c0_10 = arith.constant 0 : index
    %16 = vector.load %arg5[%c1, %c0_10] : memref<8x128xf32, #tpu.memory_space<vmem>>, vector<1x32xf32>
    %17 = vector.broadcast %16 : vector<1x32xf32> to vector<60x32xf32>
    %18 = arith.mulf %15, %17 : vector<60x32xf32>
    %cst_11 = arith.constant dense<0.000000e+00> : vector<60xf32>
    %19 = vector.multi_reduction <add>, %18, %cst_11 [1] : vector<60x32xf32> to vector<60xf32>
    %20 = vector.shape_cast %19 : vector<60xf32> to vector<60x1xf32>
    %c2 = arith.constant 2 : index
    %c0_12 = arith.constant 0 : index
    %21 = vector.load %arg5[%c2, %c0_12] : memref<8x128xf32, #tpu.memory_space<vmem>>, vector<1x1xf32>
    %22 = vector.broadcast %21 : vector<1x1xf32> to vector<60x1xf32>
    %23 = arith.addf %20, %22 : vector<60x1xf32>
    %cst_13 = arith.constant 1.000000e+00 : f32
    %24 = vector.broadcast %cst_13 : f32 to vector<60x1xf32>
    %25 = arith.subf %24, %0 : vector<60x1xf32>
    %cst_14 = arith.constant -1.000000e+30 : f32
    %26 = vector.broadcast %cst_14 : f32 to vector<60x1xf32>
    %27 = arith.mulf %25, %26 : vector<60x1xf32>
    %28 = arith.addf %23, %27 : vector<60x1xf32>
    %cst_15 = arith.constant dense<0xFF800000> : vector<1xf32>
    %29 = vector.multi_reduction <maximumf>, %28, %cst_15 [0] : vector<60x1xf32> to vector<1xf32>
    %30 = vector.shape_cast %29 : vector<1xf32> to vector<1x1xf32>
    %31 = vector.broadcast %30 : vector<1x1xf32> to vector<60x1xf32>
    %32 = arith.subf %28, %31 : vector<60x1xf32>
    %33 = math.exp %32 : vector<60x1xf32>
    %34 = tpu.iota {dimensions = array<i32: 0>} : vector<15x1xi32>
    %35 = arith.sitofp %34 : vector<15x1xi32> to vector<15x1xf32>
    %36 = tpu.iota {dimensions = array<i32: 1>} : vector<1x60xi32>
    %37 = arith.sitofp %36 : vector<1x60xi32> to vector<1x60xf32>
    %cst_16 = arith.constant 5.000000e-01 : f32
    %38 = vector.broadcast %cst_16 : f32 to vector<1x60xf32>
    %39 = arith.addf %37, %38 : vector<1x60xf32>
    %cst_17 = arith.constant 2.500000e-01 : f32
    %40 = vector.broadcast %cst_17 : f32 to vector<1x60xf32>
    %41 = arith.mulf %39, %40 : vector<1x60xf32>
    %42 = math.floor %41 : vector<1x60xf32>
    %43 = vector.broadcast %35 : vector<15x1xf32> to vector<15x60xf32>
    %44 = vector.broadcast %42 : vector<1x60xf32> to vector<15x60xf32>
    %45 = arith.cmpf oeq, %43, %44 : vector<15x60xf32>
    %46 = arith.extui %45 : vector<15x60xi1> to vector<15x60xi32>
    %47 = arith.sitofp %46 : vector<15x60xi32> to vector<15x60xf32>
    %cst_18 = arith.constant dense<0.000000e+00> : vector<15x1xf32>
    %48 = tpu.matmul %47, %33, %cst_18 {dimension_numbers = #tpu.dot_dimension_numbers<[1], [0], [0], [1], [0, 0, 1, 1], [], []>} : vector<15x60xf32>, vector<60x1xf32>, vector<15x1xf32> -> vector<15x1xf32>
    %49 = vector.broadcast %33 : vector<60x1xf32> to vector<60x32xf32>
    %50 = arith.mulf %49, %6 : vector<60x32xf32>
    %cst_19 = arith.constant dense<0.000000e+00> : vector<15x32xf32>
    %51 = tpu.matmul %47, %50, %cst_19 {dimension_numbers = #tpu.dot_dimension_numbers<[1], [0], [0], [1], [0, 0, 1, 1], [], []>} : vector<15x60xf32>, vector<60x32xf32>, vector<15x32xf32> -> vector<15x32xf32>
    %cst_20 = arith.constant 9.99999968E-21 : f32
    %52 = vector.broadcast %cst_20 : f32 to vector<15x1xf32>
    %53 = arith.addf %48, %52 : vector<15x1xf32>
    %54 = vector.broadcast %53 : vector<15x1xf32> to vector<15x32xf32>
    %55 = arith.divf %51, %54 : vector<15x32xf32>
    %c0_21 = arith.constant 0 : index
    %c0_22 = arith.constant 0 : index
    %56 = vector.load %arg6[%c0_21, %c0_22] : memref<15x32xf32, #tpu.memory_space<vmem>>, vector<15x32xf32>
    tpu.vector_store %arg6[%c0_21, %c0_22], %55 {strides = array<i32>} : memref<15x32xf32, #tpu.memory_space<vmem>>, vector<15x32xf32>,
    return
  }
  func.func @transform_0(%arg0: i32) -> (i32, i32) {
    %c0_i32 = arith.constant 0 : i32
    %c0_i32_0 = arith.constant 0 : i32
    %c0_i32_1 = arith.constant 0 : i32
    return %c0_i32, %c0_i32_0 : i32, i32
  }
  func.func @transform_1(%arg0: i32) -> (i32, i32) {
    %c0_i32 = arith.constant 0 : i32
    %c0_i32_0 = arith.constant 0 : i32
    %c0_i32_1 = arith.constant 0 : i32
    return %c0_i32, %c0_i32_0 : i32, i32
  }
  func.func @transform_2(%arg0: i32) -> (i32, i32) {
    %c0_i32 = arith.constant 0 : i32
    %c0_i32_0 = arith.constant 0 : i32
    %c0_i32_1 = arith.constant 0 : i32
    return %c0_i32, %c0_i32_0 : i32, i32
  }
  func.func @transform_3(%arg0: i32) -> (i32, i32) {
    %c0_i32 = arith.constant 0 : i32
    %c0_i32_0 = arith.constant 0 : i32
    %c0_i32_1 = arith.constant 0 : i32
    return %c0_i32, %c0_i32_0 : i32, i32
  }
  func.func @transform_4(%arg0: i32) -> (i32, i32) {
    %c0_i32 = arith.constant 0 : i32
    %c0_i32_0 = arith.constant 0 : i32
    %c0_i32_1 = arith.constant 0 : i32
    return %c0_i32, %c0_i32_0 : i32, i32
  }
  func.func @transform_5(%arg0: i32) -> (i32, i32) {
    %c0_i32 = arith.constant 0 : i32
    %c0_i32_0 = arith.constant 0 : i32
    %c0_i32_1 = arith.constant 0 : i32
    return %c0_i32, %c0_i32_0 : i32, i32
  }
}

</mosaic_0001>

<llo_original>
// kernel: tpu_custom_call.1
$region0: #{tpu_custom_call.1}
  #allocation0 [shape = 'u32[]', space=smem, size = 0x4, offset = 0x4, fixed_abs, tag = 'smem constant byte address 0x4 - core index']
  #allocation1 [shape = 'u32[72,128]{1,0:T(1,128)}', space=vmem, size = 0x9000, scoped, tag = 'internal scratch']
  %s0 = inlined_call_operand.vmem [shape: f32[60,32], index: 0, kind: input, shape index: {}]
  %s1 = inlined_call_operand.vmem [shape: f32[60,32], index: 1, kind: input, shape index: {}]
  %s2 = inlined_call_operand.vmem [shape: f32[60,1], index: 2, kind: input, shape index: {}]
  %s3 = inlined_call_operand.vmem [shape: bf16[64,32], index: 3, kind: input, shape index: {}]
  %s4 = inlined_call_operand.vmem [shape: f32[8,128], index: 4, kind: input, shape index: {}]
  %s5 = inlined_call_operand.hbm [shape: f32[15,32], index: 5, kind: output, shape index: {}]
  %s6 = sld [smem:[#allocation0]]
  $region30: #{tpu_custom_call.1} parent=0
    _
  %s8 = ssub.s32 1, %s6
  %s9 = scalar_select 0, %s8, %s6
  $region1: #{tpu_custom_call.1} parent=0
    #allocation2 [shape = 'u8[8192]{0}', space=vmem, size = 0x2000, scoped, tag = 'output window, operand 0, single buffered']
    #allocation3 [shape = 's32[1]{0}', space=sflag, size = 0x4, scoped, tag = 'scoped memory for tpu_custom_call.1']
    %10 = vsyncpa [#allocation3], 0
    // Predicated region
    $region2: #{tpu_custom_call.1} parent=1 // pred_check
      _
    $region3: #{tpu_custom_call.1} parent=1 // pred_check_branch
      %12 = sbr.rel (0) target = $region5
    $region4: #{tpu_custom_call.1} parent=1 // pred_region
      _
    $region5: #{tpu_custom_call.1} parent=1 // pred_fallthru
      _
    // Predicated region
    $region6: #{tpu_custom_call.1} parent=1 // pred_check
      _
    $region7: #{tpu_custom_call.1} parent=1 // pred_check_branch
      %14 = sbr.rel (0) target = $region9
    $region8: #{tpu_custom_call.1} parent=1 // pred_region
      _
    $region9: #{tpu_custom_call.1} parent=1 // pred_fallthru
      _
    // Predicated region
    $region10: #{tpu_custom_call.1} parent=1 // pred_check
      _
    $region11: #{tpu_custom_call.1} parent=1 // pred_check_branch
      %16 = sbr.rel (0) target = $region13
    $region12: #{tpu_custom_call.1} parent=1 // pred_region
      _
    $region13: #{tpu_custom_call.1} parent=1 // pred_fallthru
      _
    // Predicated region
    $region14: #{tpu_custom_call.1} parent=1 // pred_check
      _
    $region15: #{tpu_custom_call.1} parent=1 // pred_check_branch
      %18 = sbr.rel (0) target = $region17
    $region16: #{tpu_custom_call.1} parent=1 // pred_region
      _
    $region17: #{tpu_custom_call.1} parent=1 // pred_fallthru
      _
    // Predicated region
    $region18: #{tpu_custom_call.1} parent=1 // pred_check
      _
    $region19: #{tpu_custom_call.1} parent=1 // pred_check_branch
      %20 = sbr.rel (0) target = $region21
    $region20: #{tpu_custom_call.1} parent=1 // pred_region
      _
    $region21: #{tpu_custom_call.1} parent=1 // pred_fallthru
      _
    %v22 = vld [vmem:[%s2] sm:$0xff]
    %v23 = vld [vmem:[%s2 + $0x8] sm:$0xff]
    %v24 = vld [vmem:[%s2 + $0x10] sm:$0xff]
    %v25 = vld [vmem:[%s2 + $0x18] sm:$0xff]
    %v26 = vld [vmem:[%s2 + $0x20] sm:$0xff]
    %v27 = vld [vmem:[%s2 + $0x28] sm:$0xff]
    %v28 = vld [vmem:[%s2 + $0x30] sm:$0xff]
    %v29 = vld [vmem:[%s2 + $0x38] sm:$0xf]
    %v30 = vld [vmem:[%s0] sm:$0xff]
    %v31 = vld [vmem:[%s0 + $0x8] sm:$0xff]
    %v32 = vld [vmem:[%s0 + $0x10] sm:$0xff]
    %v33 = vld [vmem:[%s0 + $0x18] sm:$0xff]
    %v34 = vld [vmem:[%s0 + $0x20] sm:$0xff]
    %v35 = vld [vmem:[%s0 + $0x28] sm:$0xff]
    %v36 = vld [vmem:[%s0 + $0x30] sm:$0xff]
    %v37 = vld [vmem:[%s0 + $0x38] sm:$0xf]
    %39 = vset.pattern.permute.xlu0 0
    %40 = vperm.xlu0 %39, %v22
    %v41 = vpop.permute.xlu0 %40
    %44 = vset.pattern.permute.xlu0 0
    %45 = vperm.xlu0 %44, %v23
    %v46 = vpop.permute.xlu0 %45
    %49 = vset.pattern.permute.xlu0 0
    %50 = vperm.xlu0 %49, %v24
    %v51 = vpop.permute.xlu0 %50
    %54 = vset.pattern.permute.xlu0 0
    %55 = vperm.xlu0 %54, %v25
    %v56 = vpop.permute.xlu0 %55
    %59 = vset.pattern.permute.xlu0 0
    %60 = vperm.xlu0 %59, %v26
    %v61 = vpop.permute.xlu0 %60
    %64 = vset.pattern.permute.xlu0 0
    %65 = vperm.xlu0 %64, %v27
    %v66 = vpop.permute.xlu0 %65
    %69 = vset.pattern.permute.xlu0 0
    %70 = vperm.xlu0 %69, %v28
    %v71 = vpop.permute.xlu0 %70
    %74 = vset.pattern.permute.xlu0 0
    %75 = vperm.xlu0 %74, %v29
    %v76 = vpop.permute.xlu0 %75
    %v78 = vmul.f32 %v30, %v41
    %v79 = vmul.f32 %v31, %v46
    %v80 = vmul.f32 %v32, %v51
    %v81 = vmul.f32 %v33, %v56
    %v82 = vmul.f32 %v34, %v61
    %v83 = vmul.f32 %v35, %v66
    %v84 = vmul.f32 %v36, %v71
    %v85 = vmul.f32 %v37, %v76
    %v86 = vld [vmem:[%s1] sm:$0xff]
    %v87 = vld [vmem:[%s1 + $0x8] sm:$0xff]
    %v88 = vld [vmem:[%s1 + $0x10] sm:$0xff]
    %v89 = vld [vmem:[%s1 + $0x18] sm:$0xff]
    %v90 = vld [vmem:[%s1 + $0x20] sm:$0xff]
    %v91 = vld [vmem:[%s1 + $0x28] sm:$0xff]
    %v92 = vld [vmem:[%s1 + $0x30] sm:$0xff]
    %v93 = vld [vmem:[%s1 + $0x38] sm:$0xf]
    %v94 = vmul.f32 %v86, %v41
    %v95 = vmul.f32 %v87, %v46
    %v96 = vmul.f32 %v88, %v51
    %v97 = vmul.f32 %v89, %v56
    %v98 = vmul.f32 %v90, %v61
    %v99 = vmul.f32 %v91, %v66
    %v100 = vmul.f32 %v92, %v71
    %v101 = vmul.f32 %v93, %v76
    %110 = vrot.lane.b32.xlu0 %v94, 32
    %v111 = vpop.permute.xlu0 %110
    %112 = vrot.lane.b32.xlu0 %v95, 32
    %v113 = vpop.permute.xlu0 %112
    %114 = vrot.lane.b32.xlu0 %v96, 32
    %v115 = vpop.permute.xlu0 %114
    %116 = vrot.lane.b32.xlu0 %v97, 32
    %v117 = vpop.permute.xlu0 %116
    %118 = vrot.lane.b32.xlu0 %v98, 32
    %v119 = vpop.permute.xlu0 %118
    %120 = vrot.lane.b32.xlu0 %v99, 32
    %v121 = vpop.permute.xlu0 %120
    %122 = vrot.lane.b32.xlu0 %v100, 32
    %v123 = vpop.permute.xlu0 %122
    %124 = vrot.lane.b32.xlu0 %v101, 32
    %v125 = vpop.permute.xlu0 %124
    %vm134 = vcmask 261120
    %v135 = vsel %vm134, %v78, %v111
    %v136 = vsel %vm134, %v79, %v113
    %v137 = vsel %vm134, %v80, %v115
    %v138 = vsel %vm134, %v81, %v117
    %v139 = vsel %vm134, %v82, %v119
    %v140 = vsel %vm134, %v83, %v121
    %v141 = vsel %vm134, %v84, %v123
    %v142 = vsel %vm134, %v85, %v125
    %v143 = vpack.c.bf16 %v136, %v135
    %v144 = vpack.c.bf16 %v138, %v137
    %v145 = vpack.c.bf16 %v140, %v139
    %v146 = vpack.c.bf16 %v142, %v141
    %v147 = vld [vmem:[%s3] sm:$0xf]
    %v148 = vld [vmem:[%s3 + $0x4] sm:$0xf]
    %v149 = vld [vmem:[%s3 + $0x8] sm:$0xf]
    %v150 = vld [vmem:[%s3 + $0xc] sm:$0xf]
    %v151 = vld [vmem:[%s3 + $0x10] sm:$0xf]
    %v152 = vld [vmem:[%s3 + $0x14] sm:$0xf]
    %v153 = vld [vmem:[%s3 + $0x18] sm:$0xf]
    %v154 = vld [vmem:[%s3 + $0x1c] sm:$0xf]
    %v155 = vld [vmem:[%s4] sm:$0x1]
    %v156 = vperm.slane %v155, 0
    %v165 = vunpack.c.l.b16 %v147
    %v166 = vunpack.c.l.b16 %v148
    %v167 = vunpack.c.l.b16 %v149
    %v168 = vunpack.c.l.b16 %v150
    %v169 = vunpack.c.l.b16 %v151
    %v170 = vunpack.c.l.b16 %v152
    %v171 = vunpack.c.l.b16 %v153
    %v172 = vunpack.c.l.b16 %v154
    %v173 = vpack.c.b16 %v166, %v165
    %v174 = vpack.c.b16 %v168, %v167
    %v175 = vpack.c.b16 %v170, %v169
    %v176 = vpack.c.b16 %v172, %v171
    %vm181 = vcmask 523264
    %v183 = vsel %vm181, %v143, 0
    %v186 = vsel %vm181, %v144, 0
    %v189 = vsel %vm181, %v145, 0
    %v192 = vsel %vm181, %v146, 0
    %194 = vmatpush.bf16.msra.mxu0 0
    %195 = vmatpush.bf16.msra.mxu0 0
    %196 = vmatpush.bf16.msra.mxu0 0
    %197 = vmatpush.bf16.msra.mxu0 0
    %198 = vmatpush.bf16.msra.mxu0 %v176
    %199 = vmatpush.bf16.msra.mxu0 %v175
    %200 = vmatpush.bf16.msra.mxu0 %v174
    %201 = vmatpush.bf16.msra.mxu0 %v173
    %202 = vmatmul.bf16.gmra.mxu0 %v183
    %v203 = vpop.f32.mrf.mxu0
    %v204 = vadd.f32 %v156, %v203
    %v205 = vpop.f32.mrf.mxu0
    %v206 = vadd.f32 %v156, %v205
    %207 = vmatmul.bf16.gmra.mxu0 %v186
    %v208 = vpop.f32.mrf.mxu0
    %v209 = vadd.f32 %v156, %v208
    %v210 = vpop.f32.mrf.mxu0
    %v211 = vadd.f32 %v156, %v210
    %212 = vmatmul.bf16.gmra.mxu0 %v189
    %v213 = vpop.f32.mrf.mxu0
    %v214 = vadd.f32 %v156, %v213
    %v215 = vpop.f32.mrf.mxu0
    %v216 = vadd.f32 %v156, %v215
    %217 = vmatmul.bf16.gmra.mxu0 %v192
    %v218 = vpop.f32.mrf.mxu0
    %v219 = vadd.f32 %v156, %v218
    %v220 = vpop.f32.mrf.mxu0
    %v221 = vadd.f32 %v156, %v220
    %222 = vdwg.mxu0
    %v223 = vmax.f32 %v204, 0.0
    %v224 = vmax.f32 %v206, 0.0
    %v225 = vmax.f32 %v209, 0.0
    %v226 = vmax.f32 %v211, 0.0
    %v227 = vmax.f32 %v214, 0.0
    %v228 = vmax.f32 %v216, 0.0
    %v229 = vmax.f32 %v219, 0.0
    %v230 = vmax.f32 %v221, 0.0
    %v231 = vld [vmem:[%s4 + $0x1] sm:$0x1]
    %v232 = vperm.slane %v231, 0
    %v233 = vmul.f32 %v223, %v232
    %v234 = vmul.f32 %v224, %v232
    %v235 = vmul.f32 %v225, %v232
    %v236 = vmul.f32 %v226, %v232
    %v237 = vmul.f32 %v227, %v232
    %v238 = vmul.f32 %v228, %v232
    %v239 = vmul.f32 %v229, %v232
    %v240 = vmul.f32 %v230, %v232
    %v241 = vsel %vm134, %v233, 0.0
    %242 = vadd.xlane.f32.xlu0 %v241
    %v243 = vpop.xlane.xlu0 %242
    %v244 = vsel %vm134, %v234, 0.0
    %245 = vadd.xlane.f32.xlu0 %v244
    %v246 = vpop.xlane.xlu0 %245
    %v247 = vsel %vm134, %v235, 0.0
    %248 = vadd.xlane.f32.xlu0 %v247
    %v249 = vpop.xlane.xlu0 %248
    %v250 = vsel %vm134, %v236, 0.0
    %251 = vadd.xlane.f32.xlu0 %v250
    %v252 = vpop.xlane.xlu0 %251
    %v253 = vsel %vm134, %v237, 0.0
    %254 = vadd.xlane.f32.xlu0 %v253
    %v255 = vpop.xlane.xlu0 %254
    %v256 = vsel %vm134, %v238, 0.0
    %257 = vadd.xlane.f32.xlu0 %v256
    %v258 = vpop.xlane.xlu0 %257
    %v259 = vsel %vm134, %v239, 0.0
    %260 = vadd.xlane.f32.xlu0 %v259
    %v261 = vpop.xlane.xlu0 %260
    %vm262 = vcmask 257024
    %v263 = vsel %vm262, %v240, 0.0
    %264 = vadd.xlane.f32.xlu0 %v263
    %v265 = vpop.xlane.xlu0 %264
    %v266 = vld [vmem:[%s4 + $0x2] sm:$0x1]
    %v267 = vperm.slane %v266, 0
    %v268 = vadd.f32 %v243, %v267
    %v269 = vadd.f32 %v246, %v267
    %v270 = vadd.f32 %v249, %v267
    %v271 = vadd.f32 %v252, %v267
    %v272 = vadd.f32 %v255, %v267
    %v273 = vadd.f32 %v258, %v267
    %v274 = vadd.f32 %v261, %v267
    %v275 = vadd.f32 %v265, %v267
    %v276 = vsub.f32 1.0, %v22
    %v277 = vsub.f32 1.0, %v23
    %v278 = vsub.f32 1.0, %v24
    %v279 = vsub.f32 1.0, %v25
    %v280 = vsub.f32 1.0, %v26
    %v281 = vsub.f32 1.0, %v27
    %v282 = vsub.f32 1.0, %v28
    %v283 = vsub.f32 1.0, %v29
    %v284 = vmul.f32 %v276, -1e+30
    %v285 = vmul.f32 %v277, -1e+30
    %v286 = vmul.f32 %v278, -1e+30
    %v287 = vmul.f32 %v279, -1e+30
    %v288 = vmul.f32 %v280, -1e+30
    %v289 = vmul.f32 %v281, -1e+30
    %v290 = vmul.f32 %v282, -1e+30
    %v291 = vmul.f32 %v283, -1e+30
    %v292 = vadd.f32 %v268, %v284
    %v293 = vadd.f32 %v269, %v285
    %v294 = vadd.f32 %v270, %v286
    %v295 = vadd.f32 %v271, %v287
    %v296 = vadd.f32 %v272, %v288
    %v297 = vadd.f32 %v273, %v289
    %v298 = vadd.f32 %v274, %v290
    %v299 = vadd.f32 %v275, %v291
    %vm300 = vcmask 7168
    %v301 = vsel %vm300, %v292, -inf
    %v302 = vsel %vm300, %v293, -inf
    %v303 = vsel %vm300, %v294, -inf
    %v304 = vsel %vm300, %v295, -inf
    %v305 = vsel %vm300, %v296, -inf
    %v306 = vmax.f32 %v301, %v305
    %v307 = vsel %vm300, %v297, -inf
    %v308 = vmax.f32 %v302, %v307
    %v309 = vsel %vm300, %v298, -inf
    %v310 = vmax.f32 %v303, %v309
    %vm311 = vcmask 3072
    %v312 = vsel %vm311, %v299, -inf
    %v313 = vmax.f32 %v304, %v312
    %v314 = vmax.f32 %v306, %v308
    %v315 = vmax.f32 %v310, %v313
    %v316 = vmax.f32 %v314, %v315
    %v317 = vrot.slane %v316, 4
    %v318 = vmax.f32 %v316, %v317
    %v319 = vrot.slane %v318, 2
    %v320 = vmax.f32 %v318, %v319
    %v321 = vrot.slane %v320, 1
    %v322 = vmax.f32 %v320, %v321
    %v323 = vsub.f32 %v292, %v322
    %v324 = vsub.f32 %v293, %v322
    %v325 = vsub.f32 %v294, %v322
    %v326 = vsub.f32 %v295, %v322
    %v327 = vsub.f32 %v296, %v322
    %v328 = vsub.f32 %v297, %v322
    %v329 = vsub.f32 %v298, %v322
    %v330 = vsub.f32 %v299, %v322
    %v331 = vmul.f32 %v323, 1.442695
    %v332 = vpow.pop %v331
    %v333 = vmul.f32 %v324, 1.442695
    %v334 = vpow.pop %v333
    %v335 = vmul.f32 %v325, 1.442695
    %v336 = vpow.pop %v335
    %v337 = vmul.f32 %v326, 1.442695
    %v338 = vpow.pop %v337
    %v339 = vmul.f32 %v327, 1.442695
    %v340 = vpow.pop %v339
    %v341 = vmul.f32 %v328, 1.442695
    %v342 = vpow.pop %v341
    %v343 = vmul.f32 %v329, 1.442695
    %v344 = vpow.pop %v343
    %v345 = vmul.f32 %v330, 1.442695
    %v346 = vpow.pop %v345
    %v347 = vlaneseq
    %v348 = vshrl.u32 %v347, 7
    %v349 = vadd.s32 %v348, 8
    %v350 = vcvt.s32.f32 %v348
    %v351 = vcvt.s32.f32 %v349
    %v352 = vlaneseq
    %v353 = vand.u32 %v352, 127
    %v354 = vcvt.s32.f32 %v353
    %v355 = vadd.f32 %v354, 0.5
    %v356 = vmul.f32 %v355, 0.25
    %v357 = vfloor.f32 %v356
    %vm358 = vcmp.eq.f32.partialorder %v350, %v357
    %vm359 = vcmp.eq.f32.partialorder %v351, %v357
    %v360 = vsel %vm358, 1, 0
    %v361 = vsel %vm359, 1, 0
    %v362 = vcvt.s32.f32 %v360
    %v363 = vcvt.s32.f32 %v361
    %365 = vset.pattern.permute.xlu0 0
    %366 = vperm.xlu0 %365, %v332
    %v367 = vpop.permute.xlu0 %366
    %370 = vset.pattern.permute.xlu0 0
    %371 = vperm.xlu0 %370, %v334
    %v372 = vpop.permute.xlu0 %371
    %375 = vset.pattern.permute.xlu0 0
    %376 = vperm.xlu0 %375, %v336
    %v377 = vpop.permute.xlu0 %376
    %380 = vset.pattern.permute.xlu0 0
    %381 = vperm.xlu0 %380, %v338
    %v382 = vpop.permute.xlu0 %381
    %385 = vset.pattern.permute.xlu0 0
    %386 = vperm.xlu0 %385, %v340
    %v387 = vpop.permute.xlu0 %386
    %390 = vset.pattern.permute.xlu0 0
    %391 = vperm.xlu0 %390, %v342
    %v392 = vpop.permute.xlu0 %391
    %395 = vset.pattern.permute.xlu0 0
    %396 = vperm.xlu0 %395, %v344
    %v397 = vpop.permute.xlu0 %396
    %400 = vset.pattern.permute.xlu0 0
    %401 = vperm.xlu0 %400, %v346
    %v402 = vpop.permute.xlu0 %401
    %v404 = vmul.f32 %v367, %v94
    %v405 = vmul.f32 %v372, %v95
    %v406 = vmul.f32 %v377, %v96
    %v407 = vmul.f32 %v382, %v97
    %v408 = vmul.f32 %v387, %v98
    %v409 = vmul.f32 %v392, %v99
    %v410 = vmul.f32 %v397, %v100
    %v411 = vmul.f32 %v402, %v101
    %vm412 = vcmask 490496
    %v414 = vsel %vm412, %v362, 0
    %v417 = vsel %vm412, %v363, 0
    %vm419 = vcmask 1043456
    %v421 = vsel %vm419, %v411, 0
    %423 = vmatpush.msra.mxu0 0.0
    %424 = vmatpush.msra.mxu0 0.0
    %425 = vmatpush.msra.mxu0 0.0
    %426 = vmatpush.msra.mxu0 0.0
    %427 = vmatpush.msra.mxu0 0.0
    %428 = vmatpush.msra.mxu0 0.0
    %429 = vmatpush.msra.mxu0 0.0
    %430 = vmatpush.msra.mxu0 0.0
    %431 = vmatpush.msra.mxu0 %v421
    %432 = vmatpush.msra.mxu0 %v410
    %433 = vmatpush.msra.mxu0 %v409
    %434 = vmatpush.msra.mxu0 %v408
    %435 = vmatpush.msra.mxu0 %v407
    %436 = vmatpush.msra.mxu0 %v406
    %437 = vmatpush.msra.mxu0 %v405
    %438 = vmatpush.msra.mxu0 %v404
    %439 = vmatmul.f32.gmra.mxu0 %v414
    %v440 = vpop.f32.mrf.mxu0
    %v441 = vadd.f32 0.0, %v440
    %442 = vmatmul.f32.gmra.mxu0 %v417
    %v443 = vpop.f32.mrf.mxu0
    %v444 = vadd.f32 0.0, %v443
    %445 = vdwg.mxu0
    %v446 = vsel %vm419, %v346, 0
    %448 = vmatpush.msra.mxu0 0.0
    %449 = vmatpush.msra.mxu0 0.0
    %450 = vmatpush.msra.mxu0 0.0
    %451 = vmatpush.msra.mxu0 0.0
    %452 = vmatpush.msra.mxu0 0.0
    %453 = vmatpush.msra.mxu0 0.0
    %454 = vmatpush.msra.mxu0 0.0
    %455 = vmatpush.msra.mxu0 0.0
    %456 = vmatpush.msra.mxu0 %v446
    %457 = vmatpush.msra.mxu0 %v344
    %458 = vmatpush.msra.mxu0 %v342
    %459 = vmatpush.msra.mxu0 %v340
    %460 = vmatpush.msra.mxu0 %v338
    %461 = vmatpush.msra.mxu0 %v336
    %462 = vmatpush.msra.mxu0 %v334
    %463 = vmatpush.msra.mxu0 %v332
    %464 = vmatmul.f32.gmra.mxu0 %v414
    %v465 = vpop.f32.mrf.mxu0
    %v466 = vadd.f32 1e-20, %v465
    %467 = vmatmul.f32.gmra.mxu0 %v417
    %v468 = vpop.f32.mrf.mxu0
    %v469 = vadd.f32 1e-20, %v468
    %470 = vdwg.mxu0
    %472 = vset.pattern.permute.xlu0 0
    %473 = vperm.xlu0 %472, %v466
    %v474 = vpop.permute.xlu0 %473
    %477 = vset.pattern.permute.xlu0 0
    %478 = vperm.xlu0 %477, %v469
    %v479 = vpop.permute.xlu0 %478
    %v481 = vrcp.pop %v474
    %v482 = vmul.f32 %v474, %v481
    %v483 = vsub.f32 1.0, %v482
    %v484 = vmul.f32 %v481, %v483
    %v485 = vadd.f32 %v481, %v484
    %vm486 = vweird.f32 %v474
    %vm487 = vweird.f32 %v481
    %vm488 = vmor %vm486, %vm487
    %v489 = vsel %vm488, %v481, %v485
    %v490 = vand.u32 2147483647, %v474
    %vm491 = vcmp.eq.f32.partialorder %v490, 8.507059e+37
    %v492 = vand.u32 %v474, 2147483648
    %v493 = vor.u32 1.1754944e-38, %v492
    %v494 = vsel %vm491, %v493, %v489
    %v495 = vmul.f32 %v441, %v494
    %v496 = vrcp.pop %v479
    %v497 = vmul.f32 %v479, %v496
    %v498 = vsub.f32 1.0, %v497
    %v499 = vmul.f32 %v496, %v498
    %v500 = vadd.f32 %v496, %v499
    %vm501 = vweird.f32 %v479
    %vm502 = vweird.f32 %v496
    %vm503 = vmor %vm501, %vm502
    %v504 = vsel %vm503, %v496, %v500
    %v505 = vand.u32 2147483647, %v479
    %vm506 = vcmp.eq.f32.partialorder %v505, 8.507059e+37
    %v507 = vand.u32 %v479, 2147483648
    %v508 = vor.u32 1.1754944e-38, %v507
    %v509 = vsel %vm506, %v508, %v504
    %v510 = vmul.f32 %v444, %v509
    %511 = vst.msk [vmem:[#allocation2] sm:$0xff] %vm134, %v495
    %vm512 = vcmask 260096
    %513 = vst.msk [vmem:[#allocation2 + $0x8] sm:$0x7f] %vm512, %v510
    // Predicated region
    $region22: #{tpu_custom_call.1} parent=1 // pred_check
      _
    $region23: #{tpu_custom_call.1} parent=1 // pred_check_branch
      %515 = sbr.rel (0) target = $region25
    $region24: #{tpu_custom_call.1} parent=1 // pred_region
      %517 = vsyncadd [#allocation3], 0
      %s518 = sshll.u32 [#allocation2], 4
      %s519 = int_to_ptr.vmem [resolvable:$true] %s518
      %s520 = sshll.u32 %s5, 4
      %s521 = int_to_ptr.hbm [resolvable:$true] %s520
      %526 = dma.vmem_to_hbm [thread:$0]  %s519, 256, %s521, [#allocation3], 128, 128, 8
    $region25: #{tpu_custom_call.1} parent=1 // pred_fallthru
      _
    // Predicated region
    $region26: #{tpu_custom_call.1} parent=1 // pred_check
      _
    $region27: #{tpu_custom_call.1} parent=1 // pred_check_branch
      %528 = sbr.rel (0) target = $region29
    $region28: #{tpu_custom_call.1} parent=1 // pred_region
      %530 = dma.done [#allocation3], 256
    $region29: #{tpu_custom_call.1} parent=1 // pred_fallthru
      _
    %531 = vsyncpa [#allocation3], 1

</llo_original>
